<compile_context>
chip_gen: v5e
topology: v5e:2x2
jax: 0.10.0
libtpu: 0.0.40
codegen_flags: <defaults>
</compile_context>

<pallas_src>
import jax
import jax.numpy as jnp
from jax.experimental import pallas as pl
from jax.experimental.pallas import tpu as pltpu


_TINY_ELEMENTS = 1024  # below this a fused XLA reduce wins over kernel launch


# ---------------------------------------------------------------------------
# Kernel: unrolled sum over the (static, small) modality axis, scale by 1/M,
# single store.  x_ref block: (M, tR, tC); o_ref block: (tR, tC).
# ---------------------------------------------------------------------------
def _mean_fusion_kernel(x_ref, o_ref):
    m = x_ref.shape[0]                       # static compile-time constant
    acc = x_ref[0].astype(jnp.float32)
    for i in range(1, m):                    # M is tiny (number of modalities)
        acc = acc + x_ref[i].astype(jnp.float32)
    o_ref[...] = (acc * (1.0 / m)).astype(o_ref.dtype)


# ---------------------------------------------------------------------------
# Per-generation VMEM budget.
# ---------------------------------------------------------------------------
def _tpu_budget():
    """Returns (vmem_limit_bytes, single_copy_block_budget_bytes, n_tensorcores)."""
    mib = 1024 * 1024
    vmem_cap = None
    ncores = 1
    try:
        info = pltpu.get_tpu_info()
        cap = int(getattr(info, "vmem_capacity_bytes", 0) or 0)
        if cap > 0:
            vmem_cap = cap
        for attr in ("num_cores", "num_tensorcores", "tensorcores_per_chip"):
            v = getattr(info, attr, None)
            if isinstance(v, int) and v > 0:
                ncores = v
                break
    except Exception:
        pass

    if vmem_cap is None:
        # Conservative default (fits every generation incl. v7x's 64 MiB/TC).
        return 48 * mib, 20 * mib, 1

    if vmem_cap <= 64 * mib:
        # v7x-class: 64 MiB per TC, 2 TCs share the chip.
        ncores = max(ncores, 2)
        return min(vmem_cap, 48 * mib), 20 * mib, ncores
    # v5e / v6e: 128 MiB physical VMEM, single TensorCore.
    return min(vmem_cap, 96 * mib), 32 * mib, ncores


def _sublane_align(itemsize):
    # Packed-tile alignment: (8,128) f32, (16,128) bf16, (32,128) int8/fp8.
    return {4: 8, 2: 16, 1: 32}.get(itemsize, 8)


def _choose_tiles(M, R, C, itemsize, sub_align, budget, ncores):
    """Pick (tR, tC).  C is a multiple of 128.  Budget = single-copy bytes of
    (input block + output block + f32 temps) per grid step."""
    per_elem = (M + 1) * itemsize + 8        # in + out + two f32 compute slabs
    rows_min = max(1, min(R, sub_align))

    # Lane axis first: prefer full C, else the largest 128-multiple divisor.
    if C <= 128:
        tc = C
    else:
        max_tc = budget // max(per_elem * rows_min, 1)
        max_tc = max(128, (max_tc // 128) * 128)
        if C <= max_tc:
            tc = C
        else:
            q = C // 128
            best = 128
            d = 1
            while d * d <= q:
                if q % d == 0:
                    for dd in (d, q // d):
                        cand = dd * 128
                        if best < cand <= max_tc:
                            best = cand
                d += 1
            tc = best

    # Sublane axis: biggest aligned extent that fits the budget.
    max_tr = budget // max(per_elem * tc, 1)
    if max_tr >= R:
        tr = R                                # full extent (always legal)
    else:
        tr = max(sub_align, (max_tr // sub_align) * sub_align)
        tr = min(tr, R)

    # Multi-TensorCore balancing (v7x): aim for >= 2 reasonably even steps.
    if ncores >= 2:
        nR = pl.cdiv(R, tr)
        nC = pl.cdiv(C, tc)
        if nR * nC == 1 and R >= 2 * sub_align:
            half = -(-R // 2)
            tr = max(sub_align, ((half + sub_align - 1) // sub_align) * sub_align)
            tr = min(tr, R)
        elif nR > 1 and (nR % 2 == 1) and (nC % 2 == 1):
            cand = -(-R // (nR + 1))
            cand = max(sub_align, ((cand + sub_align - 1) // sub_align) * sub_align)
            if cand < tr:
                tr = cand
    return tr, tc


# ---------------------------------------------------------------------------
# Tiled mean over axis 0 for a (M, R, C) array with C % 128 == 0.
# ---------------------------------------------------------------------------
def _fused_mean_aligned(x3):
    M, R, C = x3.shape
    itemsize = jnp.dtype(x3.dtype).itemsize
    sub_align = _sublane_align(itemsize)
    vmem_limit, budget, ncores = _tpu_budget()

    tr, tc = _choose_tiles(M, R, C, itemsize, sub_align, budget, ncores)
    grid = (pl.cdiv(R, tr), pl.cdiv(C, tc))

    n_out = R * C
    cost = pl.CostEstimate(
        flops=M * n_out,                               # (M-1) adds + 1 mul / elem
        transcendentals=0,
        bytes_accessed=(M + 1) * n_out * itemsize,
    )

    return pl.pallas_call(
        _mean_fusion_kernel,
        out_shape=jax.ShapeDtypeStruct((R, C), x3.dtype),
        grid_spec=pltpu.PrefetchScalarGridSpec(
            num_scalar_prefetch=0,
            grid=grid,
            in_specs=[pl.BlockSpec((M, tr, tc), lambda i, j: (0, i, j))],
            out_specs=pl.BlockSpec((tr, tc), lambda i, j: (i, j)),
        ),
        compiler_params=pltpu.CompilerParams(
            dimension_semantics=("parallel", "parallel"),
            vmem_limit_bytes=vmem_limit,
        ),
        cost_estimate=cost,
    )(x3)


def fusion_forward(x):
    """x: (M, B, H) stacked modality embeddings -> (B, H) fused (mean) embedding."""
    x = jnp.asarray(x)
    M, B, H = x.shape
    out_dtype = x.dtype

    # Tiny inputs: pallas_call launch cost dwarfs compute; let XLA fuse it.
    if x.size <= _TINY_ELEMENTS:
        return jnp.mean(x.astype(jnp.float32), axis=0).astype(out_dtype)

    # Primary path: lane-aligned feature axis (any B — full-extent blocks are legal).
    if H % 128 == 0:
        return _fused_mean_aligned(x)

    # Fold path: keep M leading (dense VPU adds), present lane-dense 128-wide tiles.
    n = B * H
    if n % 128 == 0:
        out = _fused_mean_aligned(x.reshape(M, n // 128, 128))
        return out.reshape(B, H)

    # Fully unaligned: pad H up to a 128 multiple, reuse the tiled path, slice back.
    h_pad = ((H + 127) // 128) * 128
    xp = jnp.pad(x, ((0, 0), (0, 0), (0, h_pad - H)))
    out = _fused_mean_aligned(xp)
    return out[:, :H]


class FusionPallas:
    """Mirror of the PyTorch Fusion config container; forward runs the
    Pallas mean-fusion kernel.  (The PyTorch base class registers no params.)"""

    def __init__(self, blocks, activation, p_dropout,
                 log_hazard_hidden_layer_size, log_hazard_hidden_layers,
                 modality_hidden_layer_size, modality_hidden_layers):
        self.blocks = blocks
        self.activation = activation
        self.p_dropout = p_dropout
        self.log_hazard_hidden_layer_size = log_hazard_hidden_layer_size
        self.log_hazard_hidden_layers = log_hazard_hidden_layers
        self.modality_hidden_layer_size = modality_hidden_layer_size
        self.modality_hidden_layers = modality_hidden_layers

    def __call__(self, x):
        return fusion_forward(x)


if __name__ == "__main__":
    key = jax.random.PRNGKey(0)
    k1, k2, k3, k4, k5, k6 = jax.random.split(key, 6)

    model = FusionPallas(
        blocks=[list(range(8)), list(range(8, 16)), list(range(16, 24))],
        activation="relu",
        p_dropout=0.0,
        log_hazard_hidden_layer_size=32,
        log_hazard_hidden_layers=1,
        modality_hidden_layer_size=32,
        modality_hidden_layers=1,
    )

    def ref_mean(a):
        return jnp.mean(a.astype(jnp.float32), axis=0).astype(a.dtype)

    # 1) Primary aligned path (H % 128 == 0, B % 8 == 0).
    x_main = jax.random.normal(k1, (3, 16, 256), dtype=jnp.float32)
    out_main = jax.block_until_ready(model(x_main))
    assert out_main.shape == (16, 256)
    assert jnp.allclose(out_main, ref_mean(x_main), atol=1e-5, rtol=1e-5)

    # 2) Primary path with bf16 input (f32 accumulation, bf16 output).
    x_bf16 = jax.random.normal(k2, (3, 16, 128), dtype=jnp.float32).astype(jnp.bfloat16)
    out_bf16 = jax.block_until_ready(model(x_bf16))
    assert out_bf16.dtype == jnp.bfloat16
    assert jnp.allclose(out_bf16.astype(jnp.float32),
                        ref_mean(x_bf16).astype(jnp.float32), atol=2e-2, rtol=2e-2)

    # 3) Primary path with B not a multiple of 8 (full-extent row block).
    x_oddb = jax.random.normal(k3, (2, 12, 256), dtype=jnp.float32)
    out_oddb = jax.block_until_ready(model(x_oddb))
    assert out_oddb.shape == (12, 256)
    assert jnp.allclose(out_oddb, ref_mean(x_oddb), atol=1e-5, rtol=1e-5)

    # 4) Fold path (H not aligned, but B*H % 128 == 0) -> (M, n//128, 128).
    x_fold = jax.random.normal(k4, (2, 24, 64), dtype=jnp.float32)
    out_fold = jax.block_until_ready(model(x_fold))
    assert out_fold.shape == (24, 64)
    assert jnp.allclose(out_fold, ref_mean(x_fold), atol=1e-5, rtol=1e-5)

    # 5) Fully unaligned path (pad H to a 128 multiple, slice back).
    x_fb = jax.random.normal(k5, (3, 10, 50), dtype=jnp.float32)
    out_fb = jax.block_until_ready(model(x_fb))
    assert out_fb.shape == (10, 50)
    assert jnp.allclose(out_fb, ref_mean(x_fb), atol=1e-5, rtol=1e-5)

    # 6) Tiny fast path (pure XLA reduce).
    x_tiny = jax.random.normal(k6, (3, 4, 32), dtype=jnp.float32)
    out_tiny = jax.block_until_ready(model(x_tiny))
    assert out_tiny.shape == (4, 32)
    assert jnp.allclose(out_tiny, ref_mean(x_tiny), atol=1e-5, rtol=1e-5)

    print("KERNEL_OK")
</pallas_src>

<mosaic_0001>
module attributes {stable_mosaic.version = 11 : i64} {
  func.func @_mean_fusion_kernel(%arg0: i32, %arg1: i32, %arg2: memref<3x16x256xf32, #tpu.memory_space<vmem>>, %arg3: memref<16x256xf32, #tpu.memory_space<vmem>>) attributes {dimension_semantics = [#tpu.dimension_semantics<parallel>, #tpu.dimension_semantics<parallel>], iteration_bounds = array<i64: 1, 1>, scalar_prefetch = 0 : i64, scratch_operands = 0 : i64, tpu.core_type = #tpu.core_type<tc>, window_params = [{transform_indices = @transform_0, window_bounds = array<i64: 3, 16, 256>}, {transform_indices = @transform_1, window_bounds = array<i64: 16, 256>}]} {
    %c0 = arith.constant 0 : index
    %c0_0 = arith.constant 0 : index
    %c0_1 = arith.constant 0 : index
    %0 = vector.load %arg2[%c0, %c0_0, %c0_1] : memref<3x16x256xf32, #tpu.memory_space<vmem>>, vector<1x16x256xf32>
    %1 = vector.shape_cast %0 : vector<1x16x256xf32> to vector<16x256xf32>
    %c1 = arith.constant 1 : index
    %c0_2 = arith.constant 0 : index
    %c0_3 = arith.constant 0 : index
    %2 = vector.load %arg2[%c1, %c0_2, %c0_3] : memref<3x16x256xf32, #tpu.memory_space<vmem>>, vector<1x16x256xf32>
    %3 = vector.shape_cast %2 : vector<1x16x256xf32> to vector<16x256xf32>
    %4 = arith.addf %1, %3 : vector<16x256xf32>
    %c2 = arith.constant 2 : index
    %c0_4 = arith.constant 0 : index
    %c0_5 = arith.constant 0 : index
    %5 = vector.load %arg2[%c2, %c0_4, %c0_5] : memref<3x16x256xf32, #tpu.memory_space<vmem>>, vector<1x16x256xf32>
    %6 = vector.shape_cast %5 : vector<1x16x256xf32> to vector<16x256xf32>
    %7 = arith.addf %4, %6 : vector<16x256xf32>
    %cst = arith.constant 0.333333343 : f32
    %8 = vector.broadcast %cst : f32 to vector<16x256xf32>
    %9 = arith.mulf %7, %8 : vector<16x256xf32>
    %c0_6 = arith.constant 0 : index
    %c0_7 = arith.constant 0 : index
    %10 = vector.load %arg3[%c0_6, %c0_7] : memref<16x256xf32, #tpu.memory_space<vmem>>, vector<16x256xf32>
    tpu.vector_store %arg3[%c0_6, %c0_7], %9 {strides = array<i32>} : memref<16x256xf32, #tpu.memory_space<vmem>>, vector<16x256xf32>,
    return
  }
  func.func @transform_0(%arg0: i32, %arg1: i32) -> (i32, i32, i32) {
    %c0_i32 = arith.constant 0 : i32
    %c0_i32_0 = arith.constant 0 : i32
    return %c0_i32, %arg0, %arg1 : i32, i32, i32
  }
  func.func @transform_1(%arg0: i32, %arg1: i32) -> (i32, i32) {
    %c0_i32 = arith.constant 0 : i32
    return %arg0, %arg1 : i32, i32
  }
}

</mosaic_0001>

<llo_original>
// kernel: tpu_custom_call.1
$region0: #{tpu_custom_call.1}
  #allocation0 [shape = 'u32[]', space=smem, size = 0x4, offset = 0x4, fixed_abs, tag = 'smem constant byte address 0x4 - core index']
  #allocation1 [shape = 'u32[72,128]{1,0:T(1,128)}', space=vmem, size = 0x9000, scoped, tag = 'internal scratch']
  %s0 = inlined_call_operand.hbm [shape: f32[3,16,256], index: 0, kind: input, shape index: {}]
  %s1 = inlined_call_operand.hbm [shape: f32[16,256], index: 1, kind: output, shape index: {}]
  %s2 = sld [smem:[#allocation0]]
  $region18: #{tpu_custom_call.1} parent=0
    _
  %s4 = ssub.s32 1, %s2
  %s5 = scalar_select 0, %s4, %s2
  $region1: #{tpu_custom_call.1} parent=0
    #allocation2 [shape = 'u8[49152]{0}', space=vmem, size = 0xc000, scoped, tag = 'input window, operand 0, single buffered']
    #allocation3 [shape = 's32[1]{0}', space=sflag, size = 0x4, scoped, tag = 'scoped memory for tpu_custom_call.1']
    #allocation4 [shape = 's32[1]{0}', space=sflag, size = 0x4, scoped, tag = 'scoped memory for tpu_custom_call.1']
    #allocation5 [shape = 'u8[16384]{0}', space=vmem, size = 0x4000, scoped, tag = 'output window, operand 0, single buffered']
    %6 = vsyncpa [#allocation3], 0
    %7 = vsyncpa [#allocation4], 0
    // Predicated region
    $region2: #{tpu_custom_call.1} parent=1 // pred_check
      _
    $region3: #{tpu_custom_call.1} parent=1 // pred_check_branch
      %9 = sbr.rel (0) target = $region5
    $region4: #{tpu_custom_call.1} parent=1 // pred_region
      %11 = vsyncadd [#allocation3], 0
      %s12 = sshll.u32 %s0, 4
      %s13 = int_to_ptr.hbm [resolvable:$true] %s12
      %s14 = sshll.u32 [#allocation2], 4
      %s15 = int_to_ptr.vmem [resolvable:$true] %s14
      %20 = dma.hbm_to_vmem [thread:$0]  %s13, 1536, %s15, [#allocation3], 256, 256, 16
    $region5: #{tpu_custom_call.1} parent=1 // pred_fallthru
      _
    // Predicated region
    $region6: #{tpu_custom_call.1} parent=1 // pred_check
      _
    $region7: #{tpu_custom_call.1} parent=1 // pred_check_branch
      %22 = sbr.rel (0) target = $region9
    $region8: #{tpu_custom_call.1} parent=1 // pred_region
      %24 = dma.done [#allocation3], 1536
    $region9: #{tpu_custom_call.1} parent=1 // pred_fallthru
      _
    %v25 = vld [vmem:[#allocation2] sm:$0xff]
    %v26 = vld [vmem:[#allocation2 + $0x8] sm:$0xff]
    %v27 = vld [vmem:[#allocation2 + $0x10] sm:$0xff]
    %v28 = vld [vmem:[#allocation2 + $0x18] sm:$0xff]
    %s29 = scalar_lea.vmem [#allocation2], 32
    %v30 = vld [vmem:[%s29] sm:$0xff]
    %v31 = vld [vmem:[%s29 + $0x8] sm:$0xff]
    %v32 = vld [vmem:[%s29 + $0x10] sm:$0xff]
    %v33 = vld [vmem:[%s29 + $0x18] sm:$0xff]
    %v34 = vadd.f32 %v25, %v30
    %v35 = vadd.f32 %v26, %v31
    %v36 = vadd.f32 %v27, %v32
    %v37 = vadd.f32 %v28, %v33
    %s38 = scalar_lea.vmem [#allocation2], 64
    %v39 = vld [vmem:[%s38] sm:$0xff]
    %v40 = vld [vmem:[%s38 + $0x8] sm:$0xff]
    %v41 = vld [vmem:[%s38 + $0x10] sm:$0xff]
    %v42 = vld [vmem:[%s38 + $0x18] sm:$0xff]
    %v43 = vadd.f32 %v34, %v39
    %v44 = vadd.f32 %v35, %v40
    %v45 = vadd.f32 %v36, %v41
    %v46 = vadd.f32 %v37, %v42
    %v47 = vmul.f32 %v43, 0.33333334
    %v48 = vmul.f32 %v44, 0.33333334
    %v49 = vmul.f32 %v45, 0.33333334
    %v50 = vmul.f32 %v46, 0.33333334
    %51 = vst [vmem:[#allocation5] sm:$0xff] %v47
    %52 = vst [vmem:[#allocation5 + $0x8] sm:$0xff] %v48
    %53 = vst [vmem:[#allocation5 + $0x10] sm:$0xff] %v49
    %54 = vst [vmem:[#allocation5 + $0x18] sm:$0xff] %v50
    // Predicated region
    $region10: #{tpu_custom_call.1} parent=1 // pred_check
      _
    $region11: #{tpu_custom_call.1} parent=1 // pred_check_branch
      %56 = sbr.rel (0) target = $region13
    $region12: #{tpu_custom_call.1} parent=1 // pred_region
      %58 = vsyncadd [#allocation4], 0
      %s59 = sshll.u32 [#allocation5], 4
      %s60 = int_to_ptr.vmem [resolvable:$true] %s59
      %s61 = sshll.u32 %s1, 4
      %s62 = int_to_ptr.hbm [resolvable:$true] %s61
      %67 = dma.vmem_to_hbm [thread:$0]  %s60, 512, %s62, [#allocation4], 256, 256, 16
    $region13: #{tpu_custom_call.1} parent=1 // pred_fallthru
      _
    // Predicated region
    $region14: #{tpu_custom_call.1} parent=1 // pred_check
      _
    $region15: #{tpu_custom_call.1} parent=1 // pred_check_branch
      %69 = sbr.rel (0) target = $region17
    $region16: #{tpu_custom_call.1} parent=1 // pred_region
      %71 = dma.done [#allocation4], 512
    $region17: #{tpu_custom_call.1} parent=1 // pred_fallthru
      _
    %72 = vsyncpa [#allocation3], 1
    %73 = vsyncpa [#allocation4], 1

</llo_original>
